<compile_context>
chip_gen: v7x
topology: tpu7x:2x2x1
jax: 0.10.0
libtpu: 0.0.40
codegen_flags: <defaults>
</compile_context>

<pallas_src>
import functools

import jax
import jax.numpy as jnp
from jax import lax
from jax.experimental import pallas as pl
from jax.experimental.pallas import tpu as pltpu

_LANES = 128
_SUBLANES = 8
_MAX_TILE_ROWS = 4096   # (4096,128) f32 = 2 MiB per input per pipeline buffer
_SUB_ROWS = 512         # in-kernel compute sub-slab (bounds live temporaries)
_NUM_SPLITS = 2         # feeds both TensorCores on v7x; ~free on 1-TC v5e/v6e


def _pow_spec(p, gamma):
    """p ** gamma, specialized to repeated multiply for small integer gamma."""
    g = float(gamma)
    if g == int(g) and 0 <= int(g) <= 8:
        gi = int(g)
        if gi == 0:
            return jnp.ones_like(p)
        out = p
        for _ in range(gi - 1):
            out = out * p
        return out
    return jnp.power(p, jnp.float32(g))


def _focal_sum_kernel(logits_ref, label_ref, out_ref, *, alpha, gamma, n_valid,
                      tile_rows, sub_rows, n_sub, blocks_per_split, mask_needed):
    c = pl.program_id(0)   # core split ("parallel")
    i = pl.program_id(1)   # block within split ("arbitrary" reduction axis)

    # Output block index is (c, 0, 0) for every i -> it stays resident in VMEM
    # and acts as this split's accumulator.
    @pl.when(i == 0)
    def _():
        out_ref[...] = jnp.zeros_like(out_ref)

    # Intended absolute first row of this block.  For an odd number of blocks the
    # trailing duplicate (index-clamped) block has row0*128 >= n_valid and is
    # fully masked below, so reading duplicated data is harmless.
    block_row0 = (c * blocks_per_split + i) * tile_rows

    def partial_sum(x_raw, lab, row0):
        x = x_raw.astype(jnp.float32)                 # logits.float()
        is_pos = lab == 1
        # Signed coeff folds the final negation: -alpha (pos) / -(1-alpha) (neg).
        coeff_s = jnp.where(is_pos, jnp.float32(-alpha), jnp.float32(alpha - 1.0))

        # Consolidated transcendentals (~3 EUP ops / element).
        t = jnp.exp(-jnp.abs(x))                      # exp(-|x|)
        lt = jnp.log1p(t)                             # log(1 + exp(-|x|))
        # Exact divide keeps parity with the f32 reference (rtol 2e-5).
        # TODO(synk): on v5e pl.reciprocal(1+t, approx=True)+1 Newton step costs
        # the same as the exact divide, so the exact form is kept.
        inv = 1.0 / (1.0 + t)
        nonneg = x >= 0.0

        # Select the branch BEFORE the pow (halves pow/multiply work):
        #   p_sel    = where(is_pos, 1 - sigmoid(x), sigmoid(x))
        #   logp_sel = where(is_pos, log(sigmoid(x)), log(1 - sigmoid(x)))
        p_sel = jnp.where(is_pos == nonneg, t, 1.0) * inv
        logp_sel = -jnp.maximum(jnp.where(is_pos, -x, x), 0.0) - lt

        loss = coeff_s * _pow_spec(p_sel, gamma) * logp_sel

        if mask_needed:
            rid = lax.broadcasted_iota(jnp.int32, loss.shape, 0)
            lid = lax.broadcasted_iota(jnp.int32, loss.shape, 1)
            eid = (row0 + rid) * _LANES + lid
            loss = jnp.where(eid < n_valid, loss, 0.0)

        # Fold (sub_rows,128) -> (8,128) with pure VALU vreg adds.
        return jnp.sum(loss.reshape(-1, _SUBLANES, _LANES), axis=0)

    if n_sub == 1:
        out_ref[0] += partial_sum(logits_ref[...], label_ref[...], block_row0)
    else:
        def body(s, acc):
            start = pl.multiple_of(s * sub_rows, sub_rows)
            xs = logits_ref[pl.ds(start, sub_rows), :]
            ls = label_ref[pl.ds(start, sub_rows), :]
            return acc + partial_sum(xs, ls, block_row0 + s * sub_rows)

        out_ref[0] += lax.fori_loop(
            0, n_sub, body, jnp.zeros((_SUBLANES, _LANES), jnp.float32),
            unroll=True)


def focal_loss_v2(logits, label, alpha=0.25, gamma=2.0, reduction="mean"):
    if reduction not in ("mean", "sum"):
        # TODO(synk): reduction='none' needs an elementwise loss output kernel.
        raise NotImplementedError(reduction)

    n = logits.size
    x = logits.reshape(-1)
    lab = label.reshape(-1)
    if lab.dtype == jnp.bool_:
        lab = lab.astype(jnp.int8)    # keep the label stream narrow (1 B/elem)

    chunk = _SUBLANES * _LANES
    pad = (-n) % chunk
    if pad:
        # TODO(synk): ragged n costs one extra XLA pad pass over both streams; a
        # flat-1D block / manual-DMA path would avoid it.  Pad values are
        # irrelevant: the kernel masks every flat element index >= n to zero.
        x = jnp.pad(x, (0, pad))
        lab = jnp.pad(lab, (0, pad))

    rows = (n + pad) // _LANES                    # multiple of 8
    tile_rows = min(_MAX_TILE_ROWS, rows)
    if tile_rows > _SUB_ROWS and tile_rows % _SUB_ROWS == 0:
        sub_rows, n_sub = _SUB_ROWS, tile_rows // _SUB_ROWS
    else:
        sub_rows, n_sub = tile_rows, 1

    total_blocks = pl.cdiv(rows, tile_rows)
    bpc = pl.cdiv(total_blocks, _NUM_SPLITS)      # blocks per split
    mask_needed = (_NUM_SPLITS * bpc * tile_rows * _LANES) != n

    x2 = x.reshape(rows, _LANES)
    lab2 = lab.reshape(rows, _LANES)

    def in_map(c, i):
        # Clamp the (fully masked) duplicate trailing block of an odd split so
        # the automatic DMA never reads out of bounds.
        return (jnp.minimum(c * bpc + i, total_blocks - 1), 0)

    tile_spec = pl.BlockSpec((tile_rows, _LANES), in_map)

    kernel = functools.partial(
        _focal_sum_kernel, alpha=float(alpha), gamma=float(gamma), n_valid=n,
        tile_rows=tile_rows, sub_rows=sub_rows, n_sub=n_sub,
        blocks_per_split=bpc, mask_needed=mask_needed)

    partials = pl.pallas_call(
        kernel,
        out_shape=jax.ShapeDtypeStruct((_NUM_SPLITS, _SUBLANES, _LANES),
                                       jnp.float32),
        grid_spec=pltpu.PrefetchScalarGridSpec(
            num_scalar_prefetch=0,
            grid=(_NUM_SPLITS, bpc),
            in_specs=[tile_spec, tile_spec],
            out_specs=pl.BlockSpec((1, _SUBLANES, _LANES),
                                   lambda c, i: (c, 0, 0))),
        compiler_params=pltpu.CompilerParams(
            dimension_semantics=("parallel", "arbitrary"),
            vmem_limit_bytes=48 * 1024 * 1024),
    )(x2, lab2)

    total = jnp.sum(partials)     # 2 x (8,128) per-core partials reduced in XLA
    if reduction == "mean":
        return total / jnp.float32(n)
    return total


def _reference(logits, label, alpha=0.25, gamma=2.0, reduction="mean"):
    """Faithful JAX port of FocalSigmoidLossFuncV2.forward + reduction."""
    x = logits.astype(jnp.float32)
    is_pos = label == 1
    coeff = jnp.where(is_pos, alpha, 1.0 - alpha)
    probs = jax.nn.sigmoid(x)
    sp_neg = jnp.where(-x > 50.0, x, -jnp.log1p(jnp.exp(-x)))   # F.softplus(x,-1,50)
    sp_pos = jnp.where(x > 50.0, x, jnp.log1p(jnp.exp(x)))      # F.softplus(x, 1,50)
    log_probs = jnp.where(x >= 0.0, sp_neg, x - sp_pos)
    log_1_probs = jnp.where(x >= 0.0, -x + sp_neg, -sp_pos)
    term1 = jnp.power(1.0 - probs, gamma) * log_probs
    term2 = jnp.power(probs, gamma) * log_1_probs
    loss = -coeff * jnp.where(is_pos, term1, term2)
    return jnp.mean(loss) if reduction == "mean" else jnp.sum(loss)


if __name__ == "__main__":
    key = jax.random.PRNGKey(0)
    keys = jax.random.split(key, 6)

    # 1) Typical dense-prediction NCHW input (aligned, zero-pad path, f32 labels).
    logits = jax.random.normal(keys[0], (2, 4, 16, 16), jnp.float32) * 3.0
    label = jax.random.bernoulli(keys[1], 0.3, (2, 4, 16, 16)).astype(jnp.float32)
    out = jax.block_until_ready(focal_loss_v2(logits, label, 0.25, 2.0, "mean"))
    ref = _reference(logits, label, 0.25, 2.0, "mean")
    assert jnp.allclose(out, ref, rtol=2e-5, atol=1e-6), (out, ref)

    # 2) Ragged size + int8 labels (pad/mask path + narrow label stream).
    logits2 = jax.random.normal(keys[2], (3, 5, 7, 11), jnp.float32) * 3.0
    label2 = jax.random.bernoulli(keys[3], 0.3, (3, 5, 7, 11)).astype(jnp.int8)
    out2 = jax.block_until_ready(focal_loss_v2(logits2, label2, 0.25, 2.0, "mean"))
    ref2 = _reference(logits2, label2, 0.25, 2.0, "mean")
    assert jnp.allclose(out2, ref2, rtol=2e-5, atol=1e-6), (out2, ref2)

    # 3) Larger aligned case exercising the in-kernel sub-slab loop + 'sum'.
    logits3 = jax.random.normal(keys[4], (2, 8, 64, 128), jnp.float32) * 3.0
    label3 = jax.random.bernoulli(keys[5], 0.3, (2, 8, 64, 128)).astype(jnp.float32)
    out3 = jax.block_until_ready(focal_loss_v2(logits3, label3, 0.25, 2.0, "sum"))
    ref3 = _reference(logits3, label3, 0.25, 2.0, "sum")
    assert jnp.allclose(out3, ref3, rtol=1e-4), (out3, ref3)

    print("KERNEL_OK")
</pallas_src>

<mosaic_0001>
module attributes {stable_mosaic.version = 11 : i64} {
  func.func @_focal_sum_kernel(%arg0: i32, %arg1: i32, %arg2: memref<16x128xf32, #tpu.memory_space<vmem>>, %arg3: memref<16x128xf32, #tpu.memory_space<vmem>>, %arg4: memref<1x8x128xf32, #tpu.memory_space<vmem>>) attributes {dimension_semantics = [#tpu.dimension_semantics<parallel>, #tpu.dimension_semantics<arbitrary>], iteration_bounds = array<i64: 2, 1>, scalar_prefetch = 0 : i64, scratch_operands = 0 : i64, tpu.core_type = #tpu.core_type<tc>, window_params = [{transform_indices = @transform_0, window_bounds = array<i64: 16, 128>}, {transform_indices = @transform_1, window_bounds = array<i64: 16, 128>}, {transform_indices = @transform_2, window_bounds = array<i64: 1, 8, 128>}]} {
    %c0_i32 = arith.constant 0 : i32
    %0 = arith.cmpi eq, %arg1, %c0_i32 : i32
    %1 = arith.extui %0 : i1 to i32
    %c0_i32_0 = arith.constant 0 : i32
    %2 = arith.cmpi ne, %1, %c0_i32_0 : i32
    scf.if %2 {
      %cst_23 = arith.constant 0.000000e+00 : f32
      %59 = vector.broadcast %cst_23 : f32 to vector<1x8x128xf32>
      %c0_24 = arith.constant 0 : index
      %c0_25 = arith.constant 0 : index
      %c0_26 = arith.constant 0 : index
      %60 = vector.load %arg4[%c0_24, %c0_25, %c0_26] : memref<1x8x128xf32, #tpu.memory_space<vmem>>, vector<1x8x128xf32>
      tpu.vector_store %arg4[%c0_24, %c0_25, %c0_26], %59 {strides = array<i32>} : memref<1x8x128xf32, #tpu.memory_space<vmem>>, vector<1x8x128xf32>,
    } else {
    }
    %c1_i32 = arith.constant 1 : i32
    %3 = arith.muli %arg0, %c1_i32 : i32
    %4 = arith.addi %3, %arg1 : i32
    %c16_i32 = arith.constant 16 : i32
    %5 = arith.muli %4, %c16_i32 : i32
    %c0 = arith.constant 0 : index
    %c0_1 = arith.constant 0 : index
    %c0_2 = arith.constant 0 : index
    %6 = vector.load %arg4[%c0, %c0_1, %c0_2] : memref<1x8x128xf32, #tpu.memory_space<vmem>>, vector<1x8x128xf32>
    %7 = vector.shape_cast %6 : vector<1x8x128xf32> to vector<8x128xf32>
    %c0_3 = arith.constant 0 : index
    %c0_4 = arith.constant 0 : index
    %8 = vector.load %arg2[%c0_3, %c0_4] : memref<16x128xf32, #tpu.memory_space<vmem>>, vector<16x128xf32>
    %c0_5 = arith.constant 0 : index
    %c0_6 = arith.constant 0 : index
    %9 = vector.load %arg3[%c0_5, %c0_6] : memref<16x128xf32, #tpu.memory_space<vmem>>, vector<16x128xf32>
    %cst = arith.constant 1.000000e+00 : f32
    %10 = vector.broadcast %cst : f32 to vector<16x128xf32>
    %11 = arith.cmpf oeq, %9, %10 : vector<16x128xf32>
    %cst_7 = arith.constant -2.500000e-01 : f32
    %cst_8 = arith.constant -7.500000e-01 : f32
    %12 = vector.broadcast %cst_7 : f32 to vector<16x128xf32>
    %13 = vector.broadcast %cst_8 : f32 to vector<16x128xf32>
    %14 = arith.select %11, %12, %13 : vector<16x128xi1>, vector<16x128xf32>
    %15 = math.absf %8 : vector<16x128xf32>
    %cst_9 = arith.constant 0.000000e+00 : f32
    %16 = vector.broadcast %cst_9 : f32 to vector<16x128xf32>
    %17 = arith.subf %16, %15 : vector<16x128xf32>
    %18 = math.exp %17 : vector<16x128xf32>
    %19 = math.log1p %18 : vector<16x128xf32>
    %cst_10 = arith.constant 1.000000e+00 : f32
    %20 = vector.broadcast %cst_10 : f32 to vector<16x128xf32>
    %21 = arith.addf %20, %18 : vector<16x128xf32>
    %cst_11 = arith.constant 1.000000e+00 : f32
    %22 = vector.broadcast %cst_11 : f32 to vector<16x128xf32>
    %23 = arith.divf %22, %21 : vector<16x128xf32>
    %cst_12 = arith.constant 0.000000e+00 : f32
    %24 = vector.broadcast %cst_12 : f32 to vector<16x128xf32>
    %25 = arith.cmpf oge, %8, %24 : vector<16x128xf32>
    %26 = arith.xori %11, %25 : vector<16x128xi1>
    %cst_13 = arith.constant dense<true> : vector<16x128xi1>
    %27 = arith.xori %26, %cst_13 : vector<16x128xi1>
    %cst_14 = arith.constant 1.000000e+00 : f32
    %28 = vector.broadcast %cst_14 : f32 to vector<16x128xf32>
    %29 = arith.select %27, %18, %28 : vector<16x128xi1>, vector<16x128xf32>
    %30 = arith.mulf %29, %23 : vector<16x128xf32>
    %cst_15 = arith.constant 0.000000e+00 : f32
    %31 = vector.broadcast %cst_15 : f32 to vector<16x128xf32>
    %32 = arith.subf %31, %8 : vector<16x128xf32>
    %33 = arith.select %11, %32, %8 : vector<16x128xi1>, vector<16x128xf32>
    %cst_16 = arith.constant 0.000000e+00 : f32
    %34 = vector.broadcast %cst_16 : f32 to vector<16x128xf32>
    %35 = arith.maximumf %33, %34 : vector<16x128xf32>
    %cst_17 = arith.constant 0.000000e+00 : f32
    %36 = vector.broadcast %cst_17 : f32 to vector<16x128xf32>
    %37 = arith.subf %36, %35 : vector<16x128xf32>
    %38 = arith.subf %37, %19 : vector<16x128xf32>
    %39 = arith.mulf %30, %30 : vector<16x128xf32>
    %40 = arith.mulf %14, %39 : vector<16x128xf32>
    %41 = arith.mulf %40, %38 : vector<16x128xf32>
    %42 = tpu.iota {dimensions = array<i32: 0>} : vector<16x128xi32>
    %43 = tpu.iota {dimensions = array<i32: 1>} : vector<16x128xi32>
    %44 = vector.broadcast %5 : i32 to vector<16x128xi32>
    %45 = arith.addi %44, %42 : vector<16x128xi32>
    %c128_i32 = arith.constant 128 : i32
    %46 = vector.broadcast %c128_i32 : i32 to vector<16x128xi32>
    %47 = arith.muli %45, %46 : vector<16x128xi32>
    %48 = arith.addi %47, %43 : vector<16x128xi32>
    %c2048_i32 = arith.constant 2048 : i32
    %49 = vector.broadcast %c2048_i32 : i32 to vector<16x128xi32>
    %50 = arith.cmpi slt, %48, %49 : vector<16x128xi32>
    %cst_18 = arith.constant 0.000000e+00 : f32
    %51 = vector.broadcast %cst_18 : f32 to vector<16x128xf32>
    %52 = arith.select %50, %41, %51 : vector<16x128xi1>, vector<16x128xf32>
    %53 = vector.shape_cast %52 : vector<16x128xf32> to vector<2x8x128xf32>
    %cst_19 = arith.constant dense<0.000000e+00> : vector<8x128xf32>
    %54 = vector.multi_reduction <add>, %53, %cst_19 [0] : vector<2x8x128xf32> to vector<8x128xf32>
    %55 = arith.addf %7, %54 : vector<8x128xf32>
    %c0_20 = arith.constant 0 : index
    %c0_21 = arith.constant 0 : index
    %c0_22 = arith.constant 0 : index
    %56 = vector.load %arg4[%c0_20, %c0_21, %c0_22] : memref<1x8x128xf32, #tpu.memory_space<vmem>>, vector<1x8x128xf32>
    %57 = vector.shape_cast %56 : vector<1x8x128xf32> to vector<8x128xf32>
    %58 = vector.shape_cast %55 : vector<8x128xf32> to vector<1x8x128xf32>
    tpu.vector_store %arg4[%c0_20, %c0_21, %c0_22], %58 {strides = array<i32>} : memref<1x8x128xf32, #tpu.memory_space<vmem>>, vector<1x8x128xf32>,
    return
  }
  func.func @transform_0(%arg0: i32, %arg1: i32) -> (i32, i32) {
    %c1_i32 = arith.constant 1 : i32
    %0 = arith.muli %arg0, %c1_i32 : i32
    %1 = arith.addi %0, %arg1 : i32
    %c0_i32 = arith.constant 0 : i32
    %2 = arith.minsi %1, %c0_i32 : i32
    %c0_i32_0 = arith.constant 0 : i32
    %c0_i32_1 = arith.constant 0 : i32
    return %2, %c0_i32_0 : i32, i32
  }
  func.func @transform_1(%arg0: i32, %arg1: i32) -> (i32, i32) {
    %c1_i32 = arith.constant 1 : i32
    %0 = arith.muli %arg0, %c1_i32 : i32
    %1 = arith.addi %0, %arg1 : i32
    %c0_i32 = arith.constant 0 : i32
    %2 = arith.minsi %1, %c0_i32 : i32
    %c0_i32_0 = arith.constant 0 : i32
    %c0_i32_1 = arith.constant 0 : i32
    return %2, %c0_i32_0 : i32, i32
  }
  func.func @transform_2(%arg0: i32, %arg1: i32) -> (i32, i32, i32) {
    %c0_i32 = arith.constant 0 : i32
    %c0_i32_0 = arith.constant 0 : i32
    %c0_i32_1 = arith.constant 0 : i32
    return %arg0, %c0_i32, %c0_i32_0 : i32, i32, i32
  }
}

</mosaic_0001>

<llo_original>
// kernel: tpu_custom_call.1
$region0: #{tpu_custom_call.1}
  #allocation0 [shape = 'u32[]', space=smem, size = 0x4, offset = 0x4, fixed_abs, tag = 'smem constant byte address 0x4 - core index']
  #allocation1 [shape = 'u32[144,128]{1,0:T(1,128)}', space=vmem, size = 0x12000, scoped, tag = 'internal scratch']
  %s0 = inlined_call_operand.hbm [shape: f32[16,128], index: 0, kind: input, shape index: {}]
  %s1 = inlined_call_operand.hbm [shape: f32[16,128], index: 1, kind: input, shape index: {}]
  %s2 = inlined_call_operand.hbm [shape: f32[2,8,128], index: 2, kind: output, shape index: {}]
  %s3 = sld [smem:[#allocation0]]
  $region53: #{tpu_custom_call.1} parent=0
    _
  %s5 = ssub.s32 1, %s3
  %s6 = scalar_select 0, %s5, %s3
  $region1: #{tpu_custom_call.1} parent=0
    #allocation2 [shape = 'u8[16384]{0}', space=vmem, size = 0x4000, scoped, tag = 'input window, operand 0']
    #allocation3 [shape = 's32[2]{0}', space=sflag, size = 0x8, scoped, tag = 'scoped memory for tpu_custom_call.1']
    #allocation4 [shape = 's32[2]{0}', space=sflag, size = 0x8, scoped, tag = 'scoped memory for tpu_custom_call.1']
    #allocation5 [shape = 'u8[16384]{0}', space=vmem, size = 0x4000, scoped, tag = 'input window, operand 1']
    #allocation6 [shape = 's32[2]{0}', space=sflag, size = 0x8, scoped, tag = 'scoped memory for tpu_custom_call.1']
    #allocation7 [shape = 'u8[8192]{0}', space=vmem, size = 0x2000, scoped, tag = 'output window, operand 0']
    %7 = vsyncpa [#allocation3], 0
    %s8 = scalar_lea.sflag [#allocation3], 1
    %9 = vsyncpa %s8, 0
    %10 = vsyncpa [#allocation6], 0
    %s11 = scalar_lea.sflag [#allocation6], 1
    %12 = vsyncpa %s11, 0
    %13 = vsyncpa [#allocation4], 0
    %s14 = scalar_lea.sflag [#allocation4], 1
    %15 = vsyncpa %s14, 0
    loop: start=0, step=1, limit=4
    $region2: #{tpu_custom_call.1} parent=1 // loop_pre_header
      _
    $region3: #{tpu_custom_call.1} parent=1 // loop_header
      %s17 = sphi 0, %s21
      %p18 = scmp.ge.s32.totalorder %s17, 4
      %s24 = sphi 0, %s36
      %s25 = sphi 0, %s32
      %s26 = sphi 0, %s24
      %s27 = sphi 0, %s25
      %s28 = sphi 0, %s26
      %s29 = sphi 0, %s27
      %s45 = sphi 0, %s47
      %s48 = sphi 0, %s45
      %s49 = sphi 0, %s48
      %s65 = sphi 0, %s49
      %s77 = sphi 0, %s79
      %s80 = sphi 0, %s77
      %s81 = sphi 0, %s80
      %s97 = sphi 0, %s81
      %s103 = sphi 0, %s105
      %s106 = sphi 0, %s103
      %s107 = sphi 0, %s106
      %s123 = sphi 0, %s107
    $region4: #{tpu_custom_call.1} parent=1 // loop_header_branch
      %20 = sbr.rel (%p18) target = $region8
    $region5: #{tpu_custom_call.1} parent=1 // loop_body
      %s22 = ssub.s32 %s17, 1
      %s23 = ssub.s32 %s17, 2
      %s30 = sadd.s32 1, %s25
      %p31 = scmp.ge.s32.totalorder %s30, 1
      %s32 = scalar_select %p31, 0, %s30
      %s33 = sadd.s32 1, %s24
      %s34 = scalar_select %p31, %s33, %s24
      %p35 = scmp.ge.s32.totalorder %s34, 2
      %s36 = scalar_select %p35, 0, %s34
      %s37 = sadd.s32 %s24, %s25
      %p38 = scmp.lt.s32.totalorder %s37, 0
      %s39 = scalar_select %p38, %s37, 0
      %s40 = sadd.s32 %s36, %s32
      %p41 = scmp.lt.s32.totalorder %s40, 0
      %s42 = scalar_select %p41, %s40, 0
      %s43 = ssub.s32 %s39, %s42
      %p44 = scmp.eq.s32.totalorder %s43, 0
      %s46 = sadd.s32 %s45, 1
      %s47 = scalar_select %p44, %s45, %s46
      %p50 = pneg %p44
      %p51 = scmp.eq.s32.totalorder %s17, 1
      %p52 = por %p50, %p51
      %p53 = scmp.ne.s32.totalorder %s45, %s48
      %p54 = scmp.eq.s32.totalorder %s17, 0
      %p55 = por %p53, %p54
      %p56 = scmp.ne.s32.totalorder %s45, %s48
      %p57 = scmp.eq.s32.totalorder %s22, 1
      %p58 = por %p56, %p57
      %p59 = scmp.ne.s32.totalorder %s48, %s49
      %p60 = scmp.eq.s32.totalorder %s22, 0
      %p61 = por %p59, %p60
      %p62 = scmp.ne.s32.totalorder %s48, %s49
      %p63 = scmp.eq.s32.totalorder %s23, 1
      %p64 = por %p62, %p63
      %p66 = scmp.ne.s32.totalorder %s49, %s65
      %p67 = scmp.eq.s32.totalorder %s23, 0
      %p68 = por %p66, %p67
      %s69 = sadd.s32 %s24, %s25
      %p70 = scmp.lt.s32.totalorder %s69, 0
      %s71 = scalar_select %p70, %s69, 0
      %s72 = sadd.s32 %s36, %s32
      %p73 = scmp.lt.s32.totalorder %s72, 0
      %s74 = scalar_select %p73, %s72, 0
      %s75 = ssub.s32 %s71, %s74
      %p76 = scmp.eq.s32.totalorder %s75, 0
      %s78 = sadd.s32 %s77, 1
      %s79 = scalar_select %p76, %s77, %s78
      %p82 = pneg %p76
      %p83 = scmp.eq.s32.totalorder %s17, 1
      %p84 = por %p82, %p83
      %p85 = scmp.ne.s32.totalorder %s77, %s80
      %p86 = scmp.eq.s32.totalorder %s17, 0
      %p87 = por %p85, %p86
      %p88 = scmp.ne.s32.totalorder %s77, %s80
      %p89 = scmp.eq.s32.totalorder %s22, 1
      %p90 = por %p88, %p89
      %p91 = scmp.ne.s32.totalorder %s80, %s81
      %p92 = scmp.eq.s32.totalorder %s22, 0
      %p93 = por %p91, %p92
      %p94 = scmp.ne.s32.totalorder %s80, %s81
      %p95 = scmp.eq.s32.totalorder %s23, 1
      %p96 = por %p94, %p95
      %p98 = scmp.ne.s32.totalorder %s81, %s97
      %p99 = scmp.eq.s32.totalorder %s23, 0
      %p100 = por %p98, %p99
      %s101 = ssub.s32 %s24, %s36
      %p102 = scmp.eq.s32.totalorder %s101, 0
      %s104 = sadd.s32 %s103, 1
      %s105 = scalar_select %p102, %s103, %s104
      %p108 = pneg %p102
      %p109 = scmp.eq.s32.totalorder %s17, 1
      %p110 = por %p108, %p109
      %p111 = scmp.ne.s32.totalorder %s103, %s106
      %p112 = scmp.eq.s32.totalorder %s17, 0
      %p113 = por %p111, %p112
      %p114 = scmp.ne.s32.totalorder %s103, %s106
      %p115 = scmp.eq.s32.totalorder %s22, 1
      %p116 = por %p114, %p115
      %p117 = scmp.ne.s32.totalorder %s106, %s107
      %p118 = scmp.eq.s32.totalorder %s22, 0
      %p119 = por %p117, %p118
      %p120 = scmp.ne.s32.totalorder %s106, %s107
      %p121 = scmp.eq.s32.totalorder %s23, 1
      %p122 = por %p120, %p121
      %p124 = scmp.ne.s32.totalorder %s107, %s123
      %p125 = scmp.eq.s32.totalorder %s23, 0
      %p126 = por %p124, %p125
      %p127 = scmp.le.s32.totalorder 1, %s17
      %p128 = scmp.lt.s32.totalorder %s17, 3
      %p129 = pnand %p127, %p128
      %p130 = pneg %p129
      // Predicated region
      $region9: #{tpu_custom_call.1} parent=5 // pred_check
        _
      $region10: #{tpu_custom_call.1} parent=5 // pred_check_branch
        %132 = sbr.rel (%p129) target = $region12
      $region11: #{tpu_custom_call.1} parent=5 // pred_region
        %s133 = ssub.s32 %s17, 1
      $region12: #{tpu_custom_call.1} parent=5 // pred_fallthru
        _
      %p134 = scmp.lt.s32.totalorder %s17, 2
      // Predicated region
      $region13: #{tpu_custom_call.1} parent=5 // pred_check
        %p135 = pneg %p134
      $region14: #{tpu_custom_call.1} parent=5 // pred_check_branch
        %137 = sbr.rel (%p135) target = $region16
      $region15: #{tpu_custom_call.1} parent=5 // pred_region
        // Predicated region
        $region17: #{tpu_custom_call.1} parent=15 // pred_check
          %p138 = pneg %p55
        $region18: #{tpu_custom_call.1} parent=15 // pred_check_branch
          %140 = sbr.rel (%p138) target = $region20
        $region19: #{tpu_custom_call.1} parent=15 // pred_region
          %s141 = sand.u32 %s45, 1
          %s142 = scalar_lea.sflag [#allocation3], %s141
          %s143 = sand.u32 %s45, 1
          %s144 = smul.addr %s143, 16
          %s145 = scalar_lea.vmem [#allocation2], %s144
          %s146 = sadd.s32 %s24, %s25
          %p147 = scmp.lt.s32.totalorder %s146, 0
          %s148 = scalar_select %p147, %s146, 0
          %s149 = smul.u32 2, %s148
          %s151 = ssub.s32 256, 256
          %152 = vsyncadd %s142, %s151
          %s153 = smul.addr %s149, 128
          %s154 = scalar_lea.hbm %s0, %s153
          %s155 = sshll.u32 %s145, 4
          %s156 = int_to_ptr.vmem [resolvable:$true] %s155
          %161 = dma.hbm_to_vmem [thread:$0]  %s154, 256, %s156, %s142, 128, 128, 8
        $region20: #{tpu_custom_call.1} parent=15 // pred_fallthru
          _
        // Predicated region
        $region21: #{tpu_custom_call.1} parent=15 // pred_check
          %p162 = pneg %p87
        $region22: #{tpu_custom_call.1} parent=15 // pred_check_branch
          %164 = sbr.rel (%p162) target = $region24
        $region23: #{tpu_custom_call.1} parent=15 // pred_region
          %s165 = sand.u32 %s77, 1
          %s166 = scalar_lea.sflag [#allocation6], %s165
          %s167 = sand.u32 %s77, 1
          %s168 = smul.addr %s167, 16
          %s169 = scalar_lea.vmem [#allocation5], %s168
          %s170 = sadd.s32 %s24, %s25
          %p171 = scmp.lt.s32.totalorder %s170, 0
          %s172 = scalar_select %p171, %s170, 0
          %s173 = smul.u32 2, %s172
          %s175 = ssub.s32 256, 256
          %176 = vsyncadd %s166, %s175
          %s177 = smul.addr %s173, 128
          %s178 = scalar_lea.hbm %s1, %s177
          %s179 = sshll.u32 %s169, 4
          %s180 = int_to_ptr.vmem [resolvable:$true] %s179
          %185 = dma.hbm_to_vmem [thread:$0]  %s178, 256, %s180, %s166, 128, 128, 8
        $region24: #{tpu_custom_call.1} parent=15 // pred_fallthru
          _
      $region16: #{tpu_custom_call.1} parent=5 // pred_fallthru
        _
      %p186 = scmp.le.s32.totalorder 1, %s17
      %p187 = scmp.lt.s32.totalorder %s17, 3
      %p188 = pnand %p186, %p187
      %p189 = pneg %p188
      // Predicated region
      $region25: #{tpu_custom_call.1} parent=5 // pred_check
        _
      $region26: #{tpu_custom_call.1} parent=5 // pred_check_branch
        %191 = sbr.rel (%p188) target = $region28
      $region27: #{tpu_custom_call.1} parent=5 // pred_region
        %s192 = ssub.s32 %s17, 1
        %s193 = sand.u32 %s48, 1
        %s194 = scalar_lea.sflag [#allocation3], %s193
        %s195 = sand.u32 %s48, 1
        %s196 = smul.addr %s195, 16
        %s197 = scalar_lea.vmem [#allocation2], %s196
        // Predicated region
        $region29: #{tpu_custom_call.1} parent=27 // pred_check
          %p198 = pneg %p61
        $region30: #{tpu_custom_call.1} parent=27 // pred_check_branch
          %200 = sbr.rel (%p198) target = $region32
        $region31: #{tpu_custom_call.1} parent=27 // pred_region
          %201 = dma.done %s194, 256
        $region32: #{tpu_custom_call.1} parent=27 // pred_fallthru
          _
        %s202 = sand.u32 %s80, 1
        %s203 = scalar_lea.sflag [#allocation6], %s202
        %s204 = sand.u32 %s80, 1
        %s205 = smul.addr %s204, 16
        %s206 = scalar_lea.vmem [#allocation5], %s205
        // Predicated region
        $region33: #{tpu_custom_call.1} parent=27 // pred_check
          %p207 = pneg %p93
        $region34: #{tpu_custom_call.1} parent=27 // pred_check_branch
          %209 = sbr.rel (%p207) target = $region36
        $region35: #{tpu_custom_call.1} parent=27 // pred_region
          %210 = dma.done %s203, 256
        $region36: #{tpu_custom_call.1} parent=27 // pred_fallthru
          _
        %s211 = sand.u32 %s48, 1
        %s212 = scalar_lea.sflag [#allocation3], %s211
        %s213 = sand.u32 %s48, 1
        %s214 = smul.addr %s213, 16
        %s215 = scalar_lea.vmem [#allocation2], %s214
        %p216 = pneg %p61
        %p217 = pneg %p58
        %s218 = sand.u32 %s80, 1
        %s219 = scalar_lea.sflag [#allocation6], %s218
        %s220 = sand.u32 %s80, 1
        %s221 = smul.addr %s220, 16
        %s222 = scalar_lea.vmem [#allocation5], %s221
        %p223 = pneg %p93
        %p224 = pneg %p90
        %p225 = pneg %p119
        %p226 = pneg %p116
        %s227 = sand.u32 %s106, 1
        %s228 = scalar_lea.sflag [#allocation4], %s227
        %s229 = sand.u32 %s106, 1
        %s230 = smul.addr %s229, 8
        %s231 = scalar_lea.vmem [#allocation7], %s230
        %s232 = sadd.s32 %s26, %s27
        %p233 = scmp.lt.s32.totalorder %s232, 0
        %s234 = scalar_select %p233, %s232, 0
        %s235 = smul.u32 2, %s234
        %s236 = sadd.s32 %s26, %s27
        %p237 = scmp.lt.s32.totalorder %s236, 0
        %s238 = scalar_select %p237, %s236, 0
        %s239 = smul.u32 2, %s238
        %p240 = scmp.eq.s32.totalorder %s27, 0
        // Predicated region
        $region37: #{tpu_custom_call.1} parent=27 // pred_check
          %p241 = pneg %p240
        $region38: #{tpu_custom_call.1} parent=27 // pred_check_branch
          %243 = sbr.rel (%p241) target = $region40
        $region39: #{tpu_custom_call.1} parent=27 // pred_region
          %244 = vst [vmem:[%s231] sm:$0xff] 0.0
        $region40: #{tpu_custom_call.1} parent=27 // pred_fallthru
          _
        %s245 = sadd.s32 %s26, %s27
        %s246 = smul.u32 %s245, 16
        %v247 = vld [vmem:[%s231] sm:$0xff]
        %v248 = vld [vmem:[%s197] sm:$0xff]
        %v249 = vld [vmem:[%s197 + $0x8] sm:$0xff]
        %v250 = vld [vmem:[%s206] sm:$0xff]
        %v251 = vld [vmem:[%s206 + $0x8] sm:$0xff]
        %vm252 = vcmp.eq.f32.partialorder %v250, 1.0
        %vm253 = vcmp.eq.f32.partialorder %v251, 1.0
        %v254 = vsel %vm252, -0.25, -0.75
        %v255 = vsel %vm253, -0.25, -0.75
        %v256 = vand.u32 2147483647, %v248
        %v257 = vand.u32 2147483647, %v249
        %v258 = vsub.f32 0.0, %v256
        %v259 = vsub.f32 0.0, %v257
        %v260 = vmul.f32 %v258, 1.442695
        %v261 = vpow.pop %v260
        %v262 = vmul.f32 %v259, 1.442695
        %v263 = vpow.pop %v262
        %v264 = vadd.f32 %v261, 1.0
        %v265 = vlog2.pop %v264
        %v266 = vmul.f32 %v265, 0.6931472
        %v267 = vmul.f32 -0.5, %v261
        %v268 = vadd.f32 %v267, 1.0
        %v269 = vmul.f32 %v268, %v261
        %v270 = vand.u32 2147483647, %v261
        %vm271 = vcmp.lt.f32.partialorder %v270, 0.0004427343
        %v272 = vsel %vm271, %v269, %v266
        %v273 = vadd.f32 %v263, 1.0
        %v274 = vlog2.pop %v273
        %v275 = vmul.f32 %v274, 0.6931472
        %v276 = vmul.f32 -0.5, %v263
        %v277 = vadd.f32 %v276, 1.0
        %v278 = vmul.f32 %v277, %v263
        %v279 = vand.u32 2147483647, %v263
        %vm280 = vcmp.lt.f32.partialorder %v279, 0.0004427343
        %v281 = vsel %vm280, %v278, %v275
        %v282 = vadd.f32 %v261, 1.0
        %v283 = vadd.f32 %v263, 1.0
        %v284 = vrcp.pop %v282
        %v285 = vmul.f32 1.0, %v284
        %v286 = vrcp.pop %v283
        %v287 = vmul.f32 1.0, %v286
        %vm288 = vcmp.ge.f32.partialorder %v248, 0.0
        %vm289 = vcmp.ge.f32.partialorder %v249, 0.0
        %vm290 = vmxor %vm252, %vm288
        %vm291 = vmxor %vm253, %vm289
        %vm292 = vmxor %vm290, 1
        %vm293 = vmxor %vm291, 1
        %v294 = vsel %vm292, %v261, 1.0
        %v295 = vsel %vm293, %v263, 1.0
        %v296 = vmul.f32 %v294, %v285
        %v297 = vmul.f32 %v295, %v287
        %v298 = vsub.f32 0.0, %v248
        %v299 = vsub.f32 0.0, %v249
        %v300 = vsel %vm252, %v298, %v248
        %v301 = vsel %vm253, %v299, %v249
        %v302 = vmax.f32 %v300, 0.0
        %v303 = vmax.f32 %v301, 0.0
        %v304 = vsub.f32 0.0, %v302
        %v305 = vsub.f32 0.0, %v303
        %v306 = vsub.f32 %v304, %v272
        %v307 = vsub.f32 %v305, %v281
        %v308 = vmul.f32 %v296, %v296
        %v309 = vmul.f32 %v297, %v297
        %v310 = vmul.f32 %v254, %v308
        %v311 = vmul.f32 %v255, %v309
        %v312 = vmul.f32 %v310, %v306
        %v313 = vmul.f32 %v311, %v307
        %v314 = vlaneseq
        %v315 = vshrl.u32 %v314, 7
        %v316 = vadd.s32 %v315, 8
        %v317 = vlaneseq
        %v318 = vand.u32 %v317, 127
        %v319 = vstv %s246
        %v320 = vadd.s32 %v319, %v315
        %v321 = vadd.s32 %v319, %v316
        %v322 = vmul.u32 %v320, 128
        %v323 = vmul.u32 %v321, 128
        %v324 = vadd.s32 %v322, %v318
        %v325 = vadd.s32 %v323, %v318
        %vm326 = vcmp.lt.s32.totalorder %v324, 2048
        %vm327 = vcmp.lt.s32.totalorder %v325, 2048
        %v328 = vsel %vm326, %v312, 0.0
        %v329 = vsel %vm327, %v313, 0.0
        %v330 = vadd.f32 %v328, %v329
        %v331 = vadd.f32 %v247, %v330
        %332 = vst [vmem:[%s231] sm:$0xff] %v331
        %s333 = sand.u32 %s106, 1
        %s334 = scalar_lea.sflag [#allocation4], %s333
        %s335 = sand.u32 %s106, 1
        %s336 = smul.addr %s335, 8
        %s337 = scalar_lea.vmem [#allocation7], %s336
        // Predicated region
        $region41: #{tpu_custom_call.1} parent=27 // pred_check
          %p338 = pneg %p116
        $region42: #{tpu_custom_call.1} parent=27 // pred_check_branch
          %340 = sbr.rel (%p338) target = $region44
        $region43: #{tpu_custom_call.1} parent=27 // pred_region
          %s342 = ssub.s32 128, 128
          %343 = vsyncadd %s334, %s342
          %s344 = smul.addr %s26, 128
          %s345 = scalar_lea.hbm %s2, %s344
          %s347 = sshll.u32 %s337, 4
          %s348 = int_to_ptr.vmem [resolvable:$true] %s347
          %350 = dma.vmem_to_hbm [thread:$0]  %s348, 128, %s345, %s334
        $region44: #{tpu_custom_call.1} parent=27 // pred_fallthru
          _
      $region28: #{tpu_custom_call.1} parent=5 // pred_fallthru
        _
      %p351 = scmp.le.s32.totalorder 2, %s17
      // Predicated region
      $region45: #{tpu_custom_call.1} parent=5 // pred_check
        %p352 = pneg %p351
      $region46: #{tpu_custom_call.1} parent=5 // pred_check_branch
        %354 = sbr.rel (%p352) target = $region48
      $region47: #{tpu_custom_call.1} parent=5 // pred_region
        %s355 = ssub.s32 %s17, 2
        // Predicated region
        $region49: #{tpu_custom_call.1} parent=47 // pred_check
          %p356 = pneg %p122
        $region50: #{tpu_custom_call.1} parent=47 // pred_check_branch
          %358 = sbr.rel (%p356) target = $region52
        $region51: #{tpu_custom_call.1} parent=47 // pred_region
          %s359 = sand.u32 %s107, 1
          %s360 = scalar_lea.sflag [#allocation4], %s359
          %s361 = sand.u32 %s107, 1
          %s362 = smul.addr %s361, 8
          %s363 = scalar_lea.vmem [#allocation7], %s362
          %364 = dma.done %s360, 128
        $region52: #{tpu_custom_call.1} parent=47 // pred_fallthru
          _
      $region48: #{tpu_custom_call.1} parent=5 // pred_fallthru
        _
    $region6: #{tpu_custom_call.1} parent=1 // loop_footer
      %s21 = sadd.s32 1, %s17
    $region7: #{tpu_custom_call.1} parent=1 // loop_footer_branch
      %16 = sbr.rel target = $region3
    $region8: #{tpu_custom_call.1} parent=1 // loop_exit
      _
    %365 = vsyncpa [#allocation3], 1
    %s366 = scalar_lea.sflag [#allocation3], 1
    %367 = vsyncpa %s366, 1
    %368 = vsyncpa [#allocation6], 1
    %s369 = scalar_lea.sflag [#allocation6], 1
    %370 = vsyncpa %s369, 1
    %371 = vsyncpa [#allocation4], 1
    %s372 = scalar_lea.sflag [#allocation4], 1
    %373 = vsyncpa %s372, 1

</llo_original>
